<compile_context>
chip_gen: v5e
topology: v5e:2x2
jax: 0.10.0
libtpu: 0.0.40
codegen_flags: <defaults>
</compile_context>

<pallas_src>
import functools
import numpy as np
import jax
import jax.numpy as jnp
from jax.experimental import pallas as pl
from jax.experimental.pallas import tpu as pltpu


# ----------------------------------------------------------------------------
# helpers
# ----------------------------------------------------------------------------
def _round_up(x, m):
    return ((x + m - 1) // m) * m


# ----------------------------------------------------------------------------
# Pallas kernels
# ----------------------------------------------------------------------------
def pallas_dense(x, w_pad, b_pad, *, act=None, block_m=256):
    """y = act(x @ w_pad + b_pad).  No host-side M padding: rows are
       independent, ragged last grid block is masked by Pallas.  Operands are
       cast to bf16 inside the kernel (MXU), accumulation in f32."""
    M, K = x.shape
    Kw, Np = w_pad.shape
    assert K == Kw
    if M <= block_m:
        bm, gm = M, 1
    else:
        bm, gm = block_m, pl.cdiv(M, block_m)

    def kernel(x_ref, w_ref, b_ref, o_ref):
        acc = jnp.dot(x_ref[...].astype(jnp.bfloat16), w_ref[...],
                      preferred_element_type=jnp.float32) + b_ref[...]
        if act == "relu":
            acc = jnp.maximum(acc, 0.0)
        elif act == "tanh":
            acc = jnp.tanh(acc)
        elif act == "sigmoid":
            acc = jax.nn.sigmoid(acc)
        o_ref[...] = acc

    return pl.pallas_call(
        kernel,
        out_shape=jax.ShapeDtypeStruct((M, Np), jnp.float32),
        grid=(gm,),
        in_specs=[
            pl.BlockSpec((bm, K), lambda i: (i, 0)),
            pl.BlockSpec((Kw, Np), lambda i: (0, 0)),
            pl.BlockSpec((1, Np), lambda i: (0, 0)),
        ],
        out_specs=pl.BlockSpec((bm, Np), lambda i: (i, 0)),
        compiler_params=pltpu.CompilerParams(dimension_semantics=("parallel",)),
    )(x, w_pad, b_pad)


def pallas_hw_fused(feats, w1, b1, w2, b2, *, block_m=512):
    """Fused two-layer classifier for hw AND hw_vn in one kernel.
       w1/b1 hold [hw | hw_vn] hidden layers side by side; w2 is block-diagonal,
       so output lanes are [hw logits | hw_vn logits].  Hidden stays in VMEM.
       feats keep their natural K (= C*line_height, e.g. 48) — only the weights
       are lane-padded; no activation K-padding, no host M padding."""
    M, K = feats.shape
    Kw, Np = w1.shape
    assert K == Kw
    if M <= block_m:
        bm, gm = M, 1
    else:
        bm, gm = block_m, pl.cdiv(M, block_m)

    def kernel(x_ref, w1_ref, b1_ref, w2_ref, b2_ref, o_ref):
        x = x_ref[...].astype(jnp.bfloat16)
        h = jnp.dot(x, w1_ref[...], preferred_element_type=jnp.float32)
        h = jnp.maximum(h + b1_ref[...], 0.0)
        o_ref[...] = (jnp.dot(h.astype(jnp.bfloat16), w2_ref[...],
                              preferred_element_type=jnp.float32) + b2_ref[...])

    return pl.pallas_call(
        kernel,
        out_shape=jax.ShapeDtypeStruct((M, Np), jnp.float32),
        grid=(gm,),
        in_specs=[
            pl.BlockSpec((bm, K), lambda i: (i, 0)),
            pl.BlockSpec((Kw, Np), lambda i: (0, 0)),
            pl.BlockSpec((1, Np), lambda i: (0, 0)),
            pl.BlockSpec(w2.shape, lambda i: (0, 0)),
            pl.BlockSpec((1, Np), lambda i: (0, 0)),
        ],
        out_specs=pl.BlockSpec((bm, Np), lambda i: (i, 0)),
        compiler_params=pltpu.CompilerParams(dimension_semantics=("parallel",)),
    )(feats, w1, b1, w2, b2)


def _make_lf_kernel(steps_fwd1, steps_bwd, steps_fwd2):
    """Single-kernel LF recurrence: 3 chained segments, weights resident in
       VMEM, window+image-feature state in a VMEM scratch, last-segment path
       written to the output slab.

       Per-step update (matches the original slice/select formulation):
         dx   = sign*(0.25*size + 0.5*tanh(delta[0]))
         dy   = 0.5*tanh(delta[1]);  drot = 0.01*tanh(delta[2])
       Implemented as one full-width tanh(delta) * hoisted per-lane scale plus
       a hoisted lane-0 size term (size lane is invariant over the recurrence).
       Dot operands are bf16 (MXU), state/accumulation stays f32 (v5e-safe)."""
    def kernel(feat0_ref, w1_ref, b1_ref, w2_ref, b2_ref, path_ref, feat_ref):
        feat_ref[...] = feat0_ref[...]

        lane = jax.lax.broadcasted_iota(jnp.int32, (1, 128), 1)
        lane0 = (lane == 0).astype(jnp.float32)
        scale12 = jnp.where(lane == 1, 0.5, jnp.where(lane == 2, 0.01, 0.0))
        scale_fwd = scale12 + 0.5 * lane0
        scale_bwd = scale12 - 0.5 * lane0
        # size lane (3) never changes -> hoist the 0.25*size contribution.
        size_term = 0.25 * feat_ref[:, 3:4] * lane0          # (bm, 128), once

        w1 = w1_ref[...]
        b1 = b1_ref[...]
        w2 = w2_ref[...]
        b2 = b2_ref[...]

        def make_body(scale_vec, size_add, record):
            def body(s, carry):
                feat = feat_ref[...]
                h = jnp.tanh(
                    jnp.dot(feat.astype(jnp.bfloat16), w1,
                            preferred_element_type=jnp.float32) + b1)
                delta = jnp.dot(h.astype(jnp.bfloat16), w2,
                                preferred_element_type=jnp.float32) + b2
                new_feat = feat + jnp.tanh(delta) * scale_vec + size_add
                feat_ref[...] = new_feat
                if record:
                    path_ref[s + 1] = new_feat
                return carry
            return body

        # short segments fully unrolled; long segment partially unrolled
        jax.lax.fori_loop(0, steps_fwd1, make_body(scale_fwd, size_term, False),
                          0, unroll=True)
        jax.lax.fori_loop(0, steps_bwd, make_body(scale_bwd, -size_term, False),
                          0, unroll=True)
        path_ref[0] = feat_ref[...]
        jax.lax.fori_loop(0, steps_fwd2, make_body(scale_fwd, size_term, True),
                          0, unroll=8)
    return kernel


def lf_recurrence(feat0, w1, b1, w2, b2, *, steps_fwd1, steps_bwd, steps_fwd2):
    """All selected lines in one pallas_call.  The line dimension is split into
       2 parallel grid blocks (both TensorCores on v7x; harmless on v5e/v6e)."""
    Bp, L = feat0.shape
    P = steps_fwd2 + 1
    if Bp >= 16:
        bm, gm = Bp // 2, 2        # Bp is a multiple of 16 -> bm multiple of 8
    else:
        bm, gm = Bp, 1
    kernel = _make_lf_kernel(steps_fwd1, steps_bwd, steps_fwd2)
    return pl.pallas_call(
        kernel,
        out_shape=jax.ShapeDtypeStruct((P, Bp, L), jnp.float32),
        grid=(gm,),
        in_specs=[
            pl.BlockSpec((bm, L), lambda i: (i, 0)),
            pl.BlockSpec(w1.shape, lambda i: (0, 0)),
            pl.BlockSpec(b1.shape, lambda i: (0, 0)),
            pl.BlockSpec(w2.shape, lambda i: (0, 0)),
            pl.BlockSpec(b2.shape, lambda i: (0, 0)),
        ],
        out_specs=pl.BlockSpec((P, bm, L), lambda i: (0, i, 0)),
        scratch_shapes=[pltpu.VMEM((bm, L), jnp.float32)],
        compiler_params=pltpu.CompilerParams(dimension_semantics=("parallel",)),
    )(feat0, w1, b1, w2, b2)


@functools.partial(jax.jit, static_argnames=("block_rows",))
def pallas_shift_scale(x, *, block_rows=2048):
    """(x + 1) * 128 elementwise in a single tiled Pallas kernel (any shape)."""
    shape = x.shape
    flat = x.reshape(-1).astype(jnp.float32)
    n = flat.shape[0]
    rows = pl.cdiv(n, 128)
    rows_p = _round_up(max(rows, 1), 8)
    xp = jnp.pad(flat, (0, rows_p * 128 - n)).reshape(rows_p, 128)
    br = min(block_rows, rows_p)
    gm = pl.cdiv(rows_p, br)

    def kernel(x_ref, o_ref):
        o_ref[...] = (x_ref[...] + 1.0) * 128.0

    out = pl.pallas_call(
        kernel,
        out_shape=jax.ShapeDtypeStruct((rows_p, 128), jnp.float32),
        grid=(gm,),
        in_specs=[pl.BlockSpec((br, 128), lambda i: (i, 0))],
        out_specs=pl.BlockSpec((br, 128), lambda i: (i, 0)),
        compiler_params=pltpu.CompilerParams(dimension_semantics=("parallel",)),
    )(xp)
    return out.reshape(-1)[:n].reshape(shape)


# ----------------------------------------------------------------------------
# grid_sample (align_corners=True, padding='zeros') as a separable
# tent-weight (one-hot-style) contraction: XLA lowers the einsums to MXU
# matmuls instead of a scalarizing gather.
# TODO(synk): a Pallas row-gather (PrefetchScalarGridSpec + pl.Element) variant
#             would pipeline with the LF kernel for very large full images.
# ----------------------------------------------------------------------------
def grid_sample_bilinear(img, grid):
    # img: (C, Hin, Win) single image shared by the whole LF batch
    # grid: (B, Ho, Wo, 2) normalized to [-1, 1]
    C, Hin, Win = img.shape
    x = (grid[..., 0] + 1.0) * 0.5 * (Win - 1)          # (B, Ho, Wo)
    y = (grid[..., 1] + 1.0) * 0.5 * (Hin - 1)
    iy = jnp.arange(Hin, dtype=jnp.float32)
    ix = jnp.arange(Win, dtype=jnp.float32)
    # tent weights == bilinear corner weights, zero outside the image
    wy = jnp.maximum(0.0, 1.0 - jnp.abs(y[..., None] - iy))   # (B,Ho,Wo,Hin)
    wx = jnp.maximum(0.0, 1.0 - jnp.abs(x[..., None] - ix))   # (B,Ho,Wo,Win)
    t = jnp.einsum('bhwj,cji->bhwci', wy, img)                # MXU
    out = jnp.einsum('bhwci,bhwi->bchw', t, wx)               # (B,C,Ho,Wo)
    return out


# ----------------------------------------------------------------------------
# Synthetic sub-networks (deterministic parameters), padded/cast ONCE at init
# ----------------------------------------------------------------------------
def _dense(key, fan_in, fan_out):
    kw, kb = jax.random.split(key)
    w = jax.random.normal(kw, (fan_in, fan_out), jnp.float32) / np.sqrt(fan_in)
    b = 0.01 * jax.random.normal(kb, (fan_out,), jnp.float32)
    return w, b


def _pad_wb(w, b, kp, np_, dtype=jnp.float32):
    K, N = w.shape
    wp = jnp.zeros((kp, np_), jnp.float32).at[:K, :N].set(w).astype(dtype)
    bp = jnp.zeros((1, np_), jnp.float32).at[0, :N].set(b)
    return wp, bp


def init_params(key, c=3, patch=16, lf_hidden=32, hw_hidden=32,
                line_height=16, n_classes=10, n_classes_vn=12):
    k_sol, k_lf1, k_lf2, k_hw1, k_hw2, k_hv1, k_hv2 = jax.random.split(key, 7)
    sol_W, sol_b = _dense(k_sol, c * patch * patch, 5)
    lf_W1, lf_b1 = _dense(k_lf1, 5 + c, lf_hidden)
    lf_W2, lf_b2 = _dense(k_lf2, lf_hidden, 5)
    hw_W1, hw_b1 = _dense(k_hw1, c * line_height, hw_hidden)
    hw_W2, hw_b2 = _dense(k_hw2, hw_hidden, n_classes)
    hv_W1, hv_b1 = _dense(k_hv1, c * line_height, hw_hidden)
    hv_W2, hv_b2 = _dense(k_hv2, hw_hidden, n_classes_vn)

    # SOL head: bf16 weights (MXU native), K already lane-aligned.
    sol_Wp, sol_bp = _pad_wb(sol_W, sol_b, c * patch * patch, 128, jnp.bfloat16)
    # LF recurrence: bf16 dot operands, f32 biases/state (51-step chain).
    lf_W1p, lf_b1p = _pad_wb(lf_W1, lf_b1, 128, 128, jnp.bfloat16)
    lf_W2p, lf_b2p = _pad_wb(lf_W2, lf_b2, 128, 128, jnp.bfloat16)

    # hw + hw_vn fused: first layer side-by-side (K stays C*line_height — no
    # activation padding needed), second layer block-diagonal.
    khw = c * line_height
    w1cat = (jnp.zeros((khw, 128), jnp.float32)
             .at[:, :hw_hidden].set(hw_W1)
             .at[:, hw_hidden:2 * hw_hidden].set(hv_W1)).astype(jnp.bfloat16)
    b1cat = (jnp.zeros((1, 128), jnp.float32)
             .at[0, :hw_hidden].set(hw_b1)
             .at[0, hw_hidden:2 * hw_hidden].set(hv_b1))
    w2cat = (jnp.zeros((128, 128), jnp.float32)
             .at[:hw_hidden, :n_classes].set(hw_W2)
             .at[hw_hidden:2 * hw_hidden,
                 n_classes:n_classes + n_classes_vn].set(hv_W2)).astype(jnp.bfloat16)
    b2cat = (jnp.zeros((1, 128), jnp.float32)
             .at[0, :n_classes].set(hw_b2)
             .at[0, n_classes:n_classes + n_classes_vn].set(hv_b2))

    return {
        "patch": patch,
        "line_height": line_height,
        "n_classes": n_classes,
        "n_classes_vn": n_classes_vn,
        "sol": {"W": sol_Wp, "b": sol_bp},
        "lf": {"W1": lf_W1p, "b1": lf_b1p, "W2": lf_W2p, "b2": lf_b2p},
        "hwcat": {"W1": w1cat, "b1": b1cat, "W2": w2cat, "b2": b2cat},
    }


# ----------------------------------------------------------------------------
# Jitted stage wrappers
# ----------------------------------------------------------------------------
@functools.partial(jax.jit, static_argnames=("patch",))
def sol_forward(sol_w, sol_b, resized_img, *, patch):
    """Start-of-line finder: per-patch linear head -> (B, n_patches, 5)
       columns are [confidence, x, y, rotation, size]."""
    B, C, H, W = resized_img.shape
    gh, gw = H // patch, W // patch
    patches = resized_img.reshape(B, C, gh, patch, gw, patch)
    patches = jnp.transpose(patches, (0, 2, 4, 1, 3, 5)).reshape(
        B * gh * gw, C * patch * patch)
    out = pallas_dense(patches, sol_w, sol_b)[:, :5]

    conf = jax.nn.sigmoid(out[:, 0:1])
    centers_x = (jnp.arange(gw, dtype=jnp.float32) + 0.5) * patch
    centers_y = (jnp.arange(gh, dtype=jnp.float32) + 0.5) * patch
    cx, cy = jnp.meshgrid(centers_x, centers_y)
    cx = jnp.tile(cx.reshape(-1, 1), (B, 1))
    cy = jnp.tile(cy.reshape(-1, 1), (B, 1))
    px = cx + patch * jnp.tanh(out[:, 1:2])
    py = cy + patch * jnp.tanh(out[:, 2:3])
    rot = 0.1 * jnp.tanh(out[:, 3:4])
    size = 4.0 + 4.0 * jax.nn.sigmoid(out[:, 4:5])
    starts = jnp.concatenate([conf, px, py, rot, size], axis=1)
    return starts.reshape(B, gh * gw, 5)


@functools.partial(jax.jit, static_argnames=("line_height",))
def lf_pipeline(w1, b1, w2, b2, full_img, img_feat, sol_batch, *, line_height):
    """Line follower (5 fwd + 6 bwd + 40 fwd steps fused into ONE Pallas kernel
       over ALL lines) + sampling-grid construction + bilinear line extraction.
       Returns (path, line_batch): path (P, B, 5), line_batch (B, C, lh, P)."""
    # TODO(synk): allow_end_early (dynamic stopping) is not modeled; fixed steps.
    B = sol_batch.shape[0]
    _, C, H, W = full_img.shape
    Bp = _round_up(max(B, 1), 16)

    # state lanes: [x, y, rot, size, conf, img_feat(0..C-1), 0...]
    feat0 = jnp.zeros((Bp, 128), jnp.float32)
    feat0 = feat0.at[:B, 0:5].set(sol_batch.astype(jnp.float32))
    feat0 = feat0.at[:B, 5:5 + C].set(jnp.broadcast_to(img_feat, (B, C)))

    path_pad = lf_recurrence(feat0, w1, b1, w2, b2,
                             steps_fwd1=5, steps_bwd=6, steps_fwd2=40)
    path = path_pad[:, :B, :5]                         # (P, B, 5)

    # sampling grid over the transposed image (matches the reference code)
    pathT = jnp.transpose(path, (1, 0, 2))             # (B, P, 5)
    t_off = jnp.linspace(-0.5, 0.5, line_height)
    ys = pathT[..., 1:2] + pathT[..., 3][..., None] * t_off[None, None, :]
    xs = jnp.broadcast_to(pathT[..., 0:1], ys.shape)
    gx = 2.0 * ys / (H - 1) - 1.0
    gy = 2.0 * xs / (W - 1) - 1.0
    grid_lines = jnp.stack([gx, gy], axis=-1)          # (B, P, lh, 2)

    img_t = jnp.transpose(full_img[0], (0, 2, 1))      # (C, W, H) — no B broadcast
    line_batch = grid_sample_bilinear(img_t, grid_lines)   # (B, C, P, lh)
    line_batch = jnp.transpose(line_batch, (0, 1, 3, 2))   # (B, C, lh, P)
    return path, line_batch


@functools.partial(jax.jit, static_argnames=("n_classes", "n_classes_vn"))
def hw_both_forward(w1, b1, w2, b2, line_batch, *, n_classes, n_classes_vn):
    """Fused hw + hw_vn per-column classifier -> ((T,B,nc), (T,B,ncv))."""
    B, C, H, W = line_batch.shape
    feats = jnp.transpose(line_batch, (0, 3, 1, 2)).reshape(B * W, C * H)
    logits = pallas_hw_fused(feats, w1, b1, w2, b2)        # (B*W, 128)
    hw_logits = logits[:, :n_classes].reshape(B, W, n_classes)
    vn_logits = logits[:, n_classes:n_classes + n_classes_vn].reshape(
        B, W, n_classes_vn)
    return (jnp.transpose(hw_logits, (1, 0, 2)),
            jnp.transpose(vn_logits, (1, 0, 2)))


# ----------------------------------------------------------------------------
# E2EModel.forward equivalent
# ----------------------------------------------------------------------------
def e2e_forward(params, x, use_full_img=True, sol_threshold=0.1,
                lf_batch_size=10, mode="hw"):
    # lf_batch_size is kept for API parity; all lines go through one LF call.
    del lf_batch_size
    resized_img = jnp.asarray(x["resized_img"], jnp.float32)
    if use_full_img:
        full_img = jnp.asarray(x["full_img"], jnp.float32)
        scale = x["resize_scale"]
        results_scale = 1.0
    else:
        full_img = resized_img
        scale = 1.0
        results_scale = x["resize_scale"]

    patch = params["patch"]
    line_height = params["line_height"]

    original_starts = sol_forward(params["sol"]["W"], params["sol"]["b"],
                                  resized_img, patch=patch)
    start = original_starts

    # --- host-side data-dependent selection (glue, same as PyTorch) ---
    conf_np = np.asarray(jax.device_get(start[..., 0:1]))
    sorted_start = -np.sort(-conf_np, axis=1)  # descending along dim 1
    second = min(1, sorted_start.shape[1] - 1)
    soft_sol_threshold = float(sorted_start[0, second, 0])
    accept_threshold = min(sol_threshold, soft_sol_threshold)
    select_idx = np.where(conf_np >= accept_threshold)[1]
    start = start[:, select_idx, :]
    start = jnp.transpose(start, (1, 0, 2))  # (K, 1, 5)
    positions = jnp.concatenate(
        [start[..., 1:3] * scale, start[..., 3:4],
         start[..., 4:5] * scale, start[..., 0:1]], axis=2)  # [x, y, rot, size, conf]

    n_sel = int(positions.shape[0])
    # bucket the line count (power of two, >=16) so LF / hw jits compile once
    n_bucket = max(16, 1 << int(np.ceil(np.log2(max(n_sel, 1)))))
    sol_all = positions[:, 0, :]                              # (n_sel, 5)
    if n_bucket > n_sel:
        sol_all = jnp.concatenate(
            [sol_all, jnp.broadcast_to(sol_all[-1:], (n_bucket - n_sel, 5))], axis=0)

    # hoisted: global image feature for the LF MLP, computed once
    img_feat = jnp.mean(full_img, axis=(2, 3))   # (1, C)

    # --- single LF pass over every selected line ---
    lfp = params["lf"]
    path, all_lines = lf_pipeline(
        lfp["W1"], lfp["b1"], lfp["W2"], lfp["b2"],
        full_img, img_feat, sol_all, line_height=line_height)
    # path: (P, n_bucket, 5); all_lines: (n_bucket, C, lh, P)

    xy_steps = path[:, :n_sel, 0:2]                           # (P, n_sel, 2)
    lf_xy_positions = [xy_steps[j] for j in range(xy_steps.shape[0])]

    # line images: ONE elementwise kernel + ONE device->host transfer;
    # per-line (h, w, c) layout comes from a zero-copy numpy transpose view.
    line_imgs_np = np.asarray(jax.device_get(pallas_shift_scale(all_lines)))
    line_images = [np.transpose(line_imgs_np[i], (1, 2, 0)) for i in range(n_sel)]

    # fused hw + hw_vn classifier over every line at once
    # TODO(synk): len_label-conditioned hw_vn path for non-'hw' modes not modeled.
    hwc = params["hwcat"]
    hw_pred, hw_vn_pred = hw_both_forward(
        hwc["W1"], hwc["b1"], hwc["W2"], hwc["b2"], all_lines,
        n_classes=params["n_classes"], n_classes_vn=params["n_classes_vn"])

    hw_out = jnp.transpose(hw_pred, (1, 0, 2))[:n_sel]        # (N_lines, T, nc)
    hw_vn_out = jnp.transpose(hw_vn_pred, (1, 0, 2))[:n_sel]  # (N_lines, T, ncv)

    return {
        "original_sol": original_starts,
        "sol": positions,
        "lf": lf_xy_positions,
        "hw": hw_out,
        "hw_vn": hw_vn_out,
        "results_scale": results_scale,
        "line_imgs": line_images,
    }


# ----------------------------------------------------------------------------
if __name__ == "__main__":
    key = jax.random.PRNGKey(0)
    k_param, k_resized, k_full = jax.random.split(key, 3)

    params = init_params(k_param, c=3, patch=16, lf_hidden=32, hw_hidden=32,
                         line_height=16, n_classes=10, n_classes_vn=12)

    resized_img = jax.random.normal(k_resized, (1, 3, 32, 32), jnp.float32)
    full_img = jax.random.normal(k_full, (1, 3, 64, 64), jnp.float32)
    x = {"resized_img": resized_img, "full_img": full_img, "resize_scale": 2.0}

    out = e2e_forward(params, x)
    jax.block_until_ready(out["hw"])
    jax.block_until_ready(out["hw_vn"])
    jax.block_until_ready(out["sol"])
    jax.block_until_ready(out["lf"][0])

    assert out["hw"].ndim == 3 and out["hw_vn"].ndim == 3
    assert len(out["line_imgs"]) == out["hw"].shape[0]
    assert bool(jnp.all(jnp.isfinite(out["hw"])))
    print("KERNEL_OK")
</pallas_src>

<mosaic_0001>
module attributes {stable_mosaic.version = 11 : i64} {
  func.func @kernel(%arg0: i32, %arg1: memref<4x768xf32, #tpu.memory_space<vmem>>, %arg2: memref<768x128xbf16, #tpu.memory_space<vmem>>, %arg3: memref<1x128xf32, #tpu.memory_space<vmem>>, %arg4: memref<4x128xf32, #tpu.memory_space<vmem>>) attributes {dimension_semantics = [#tpu.dimension_semantics<parallel>], iteration_bounds = array<i64: 1>, scalar_prefetch = 0 : i64, scratch_operands = 0 : i64, tpu.core_type = #tpu.core_type<tc>, window_params = [{transform_indices = @transform_0, window_bounds = array<i64: 4, 768>}, {pipeline_mode = #tpu.pipeline_mode<synchronous>, transform_indices = @transform_1, window_bounds = array<i64: 768, 128>}, {pipeline_mode = #tpu.pipeline_mode<synchronous>, transform_indices = @transform_2, window_bounds = array<i64: 1, 128>}, {transform_indices = @transform_3, window_bounds = array<i64: 4, 128>}]} {
    %c0 = arith.constant 0 : index
    %c0_0 = arith.constant 0 : index
    %0 = vector.load %arg1[%c0, %c0_0] : memref<4x768xf32, #tpu.memory_space<vmem>>, vector<4x768xf32>
    %1 = arith.truncf %0 : vector<4x768xf32> to vector<4x768xbf16>
    %c0_1 = arith.constant 0 : index
    %c0_2 = arith.constant 0 : index
    %2 = vector.load %arg2[%c0_1, %c0_2] : memref<768x128xbf16, #tpu.memory_space<vmem>>, vector<768x128xbf16>
    %cst = arith.constant dense<0.000000e+00> : vector<4x128xf32>
    %3 = tpu.matmul %1, %2, %cst {dimension_numbers = #tpu.dot_dimension_numbers<[1], [0], [0], [1], [0, 0, 1, 1], [], []>} : vector<4x768xbf16>, vector<768x128xbf16>, vector<4x128xf32> -> vector<4x128xf32>
    %c0_3 = arith.constant 0 : index
    %c0_4 = arith.constant 0 : index
    %4 = vector.load %arg3[%c0_3, %c0_4] : memref<1x128xf32, #tpu.memory_space<vmem>>, vector<1x128xf32>
    %5 = vector.broadcast %4 : vector<1x128xf32> to vector<4x128xf32>
    %6 = arith.addf %3, %5 : vector<4x128xf32>
    %c0_5 = arith.constant 0 : index
    %c0_6 = arith.constant 0 : index
    %7 = vector.load %arg4[%c0_5, %c0_6] : memref<4x128xf32, #tpu.memory_space<vmem>>, vector<4x128xf32>
    tpu.vector_store %arg4[%c0_5, %c0_6], %6 {strides = array<i32>} : memref<4x128xf32, #tpu.memory_space<vmem>>, vector<4x128xf32>,
    return
  }
  func.func @transform_0(%arg0: i32) -> (i32, i32) {
    %c0_i32 = arith.constant 0 : i32
    %c0_i32_0 = arith.constant 0 : i32
    return %arg0, %c0_i32 : i32, i32
  }
  func.func @transform_1(%arg0: i32) -> (i32, i32) {
    %c0_i32 = arith.constant 0 : i32
    %c0_i32_0 = arith.constant 0 : i32
    %c0_i32_1 = arith.constant 0 : i32
    return %c0_i32, %c0_i32_0 : i32, i32
  }
  func.func @transform_2(%arg0: i32) -> (i32, i32) {
    %c0_i32 = arith.constant 0 : i32
    %c0_i32_0 = arith.constant 0 : i32
    %c0_i32_1 = arith.constant 0 : i32
    return %c0_i32, %c0_i32_0 : i32, i32
  }
  func.func @transform_3(%arg0: i32) -> (i32, i32) {
    %c0_i32 = arith.constant 0 : i32
    %c0_i32_0 = arith.constant 0 : i32
    return %arg0, %c0_i32 : i32, i32
  }
}

</mosaic_0001>

<llo_original>
// kernel: sol_forward.1
$region0: #{sol_forward.1}
  #allocation0 [shape = 'u32[]', space=smem, size = 0x4, offset = 0x4, fixed_abs, tag = 'smem constant byte address 0x4 - core index']
  #allocation1 [shape = 'u32[72,128]{1,0:T(1,128)}', space=vmem, size = 0x9000, scoped, tag = 'internal scratch']
  %s0 = inlined_call_operand.vmem [shape: f32[4,768], index: 0, kind: input, shape index: {}]
  %s1 = inlined_call_operand.vmem [shape: bf16[768,128], index: 1, kind: input, shape index: {}]
  %s2 = inlined_call_operand.vmem [shape: f32[1,128], index: 2, kind: input, shape index: {}]
  %s3 = inlined_call_operand.vmem [shape: f32[4,128], index: 3, kind: output, shape index: {}]
  %s4 = sld [smem:[#allocation0]]
  $region22: #{sol_forward.1} parent=0
    _
  %s6 = ssub.s32 1, %s4
  %s7 = scalar_select 0, %s6, %s4
  // Predicated region
  $region2: #{sol_forward.1} parent=0 // pred_check
    _
  $region3: #{sol_forward.1} parent=0 // pred_check_branch
    %9 = sbr.rel (0) target = $region5
  $region4: #{sol_forward.1} parent=0 // pred_region
    _
  $region5: #{sol_forward.1} parent=0 // pred_fallthru
    _
  // Predicated region
  $region6: #{sol_forward.1} parent=0 // pred_check
    _
  $region7: #{sol_forward.1} parent=0 // pred_check_branch
    %11 = sbr.rel (0) target = $region9
  $region8: #{sol_forward.1} parent=0 // pred_region
    _
  $region9: #{sol_forward.1} parent=0 // pred_fallthru
    _
  // Predicated region
  $region10: #{sol_forward.1} parent=0 // pred_check
    _
  $region11: #{sol_forward.1} parent=0 // pred_check_branch
    %13 = sbr.rel (0) target = $region13
  $region12: #{sol_forward.1} parent=0 // pred_region
    _
  $region13: #{sol_forward.1} parent=0 // pred_fallthru
    _
  %v14 = vld [vmem:[%s0] sm:$0xff]
  %v15 = vld [vmem:[%s0 + $0x8] sm:$0xff]
  %v16 = vld [vmem:[%s0 + $0x10] sm:$0xff]
  %20 = vst [vmem:[#allocation1] ss:$2 sm:$0xff] %v14
  %s21 = scalar_lea.vmem [#allocation1], 16
  %22 = vst [vmem:[%s21] ss:$2 sm:$0xff] %v15
  %s23 = scalar_lea.vmem [#allocation1], 32
  %24 = vst [vmem:[%s23] ss:$2 sm:$0xff] %v16
  %v25 = vld.sshfl [vmem:[#allocation1] sm:$0xff pattern:$0x75316420]
  %v26 = vld.sshfl [vmem:[#allocation1 + $0x8] sm:$0xff pattern:$0x75316420]
  %v27 = vld.sshfl [vmem:[#allocation1 + $0x10] sm:$0xff pattern:$0x75316420]
  %v28 = vld.sshfl [vmem:[#allocation1 + $0x18] sm:$0xff pattern:$0x75316420]
  %v29 = vld.sshfl [vmem:[#allocation1 + $0x20] sm:$0xff pattern:$0x75316420]
  %v30 = vld.sshfl [vmem:[#allocation1 + $0x28] sm:$0xff pattern:$0x75316420]
  %v37 = vpack.c.bf16 %v25, %v25
  %v38 = vpack.c.bf16 %v26, %v26
  %v39 = vpack.c.bf16 %v27, %v27
  %v40 = vpack.c.bf16 %v28, %v28
  %v41 = vpack.c.bf16 %v29, %v29
  %v42 = vpack.c.bf16 %v30, %v30
  %v43 = vld [vmem:[%s1] sm:$0xf]
  %v44 = vld [vmem:[%s1 + $0x4] sm:$0xf]
  %v45 = vld [vmem:[%s1 + $0x8] sm:$0xf]
  %v46 = vld [vmem:[%s1 + $0xc] sm:$0xf]
  %v47 = vld [vmem:[%s1 + $0x10] sm:$0xf]
  %v48 = vld [vmem:[%s1 + $0x14] sm:$0xf]
  %v49 = vld [vmem:[%s1 + $0x18] sm:$0xf]
  %v50 = vld [vmem:[%s1 + $0x1c] sm:$0xf]
  %v51 = vld [vmem:[%s1 + $0x20] sm:$0xf]
  %v52 = vld [vmem:[%s1 + $0x24] sm:$0xf]
  %v53 = vld [vmem:[%s1 + $0x28] sm:$0xf]
  %v54 = vld [vmem:[%s1 + $0x2c] sm:$0xf]
  %v55 = vld [vmem:[%s1 + $0x30] sm:$0xf]
  %v56 = vld [vmem:[%s1 + $0x34] sm:$0xf]
  %v57 = vld [vmem:[%s1 + $0x38] sm:$0xf]
  %v58 = vld [vmem:[%s1 + $0x3c] sm:$0xf]
  %v59 = vld [vmem:[%s1 + $0x40] sm:$0xf]
  %v60 = vld [vmem:[%s1 + $0x44] sm:$0xf]
  %v61 = vld [vmem:[%s1 + $0x48] sm:$0xf]
  %v62 = vld [vmem:[%s1 + $0x4c] sm:$0xf]
  %v63 = vld [vmem:[%s1 + $0x50] sm:$0xf]
  %v64 = vld [vmem:[%s1 + $0x54] sm:$0xf]
  %v65 = vld [vmem:[%s1 + $0x58] sm:$0xf]
  %v66 = vld [vmem:[%s1 + $0x5c] sm:$0xf]
  %v67 = vld [vmem:[%s1 + $0x60] sm:$0xf]
  %v68 = vld [vmem:[%s1 + $0x64] sm:$0xf]
  %v69 = vld [vmem:[%s1 + $0x68] sm:$0xf]
  %v70 = vld [vmem:[%s1 + $0x6c] sm:$0xf]
  %v71 = vld [vmem:[%s1 + $0x70] sm:$0xf]
  %v72 = vld [vmem:[%s1 + $0x74] sm:$0xf]
  %v73 = vld [vmem:[%s1 + $0x78] sm:$0xf]
  %v74 = vld [vmem:[%s1 + $0x7c] sm:$0xf]
  %v75 = vld [vmem:[%s1 + $0x80] sm:$0xf]
  %v76 = vld [vmem:[%s1 + $0x84] sm:$0xf]
  %v77 = vld [vmem:[%s1 + $0x88] sm:$0xf]
  %v78 = vld [vmem:[%s1 + $0x8c] sm:$0xf]
  %v79 = vld [vmem:[%s1 + $0x90] sm:$0xf]
  %v80 = vld [vmem:[%s1 + $0x94] sm:$0xf]
  %v81 = vld [vmem:[%s1 + $0x98] sm:$0xf]
  %v82 = vld [vmem:[%s1 + $0x9c] sm:$0xf]
  %v83 = vld [vmem:[%s1 + $0xa0] sm:$0xf]
  %v84 = vld [vmem:[%s1 + $0xa4] sm:$0xf]
  %v85 = vld [vmem:[%s1 + $0xa8] sm:$0xf]
  %v86 = vld [vmem:[%s1 + $0xac] sm:$0xf]
  %v87 = vld [vmem:[%s1 + $0xb0] sm:$0xf]
  %v88 = vld [vmem:[%s1 + $0xb4] sm:$0xf]
  %v89 = vld [vmem:[%s1 + $0xb8] sm:$0xf]
  %v90 = vld [vmem:[%s1 + $0xbc] sm:$0xf]
  %v91 = vld [vmem:[%s1 + $0xc0] sm:$0xf]
  %v92 = vld [vmem:[%s1 + $0xc4] sm:$0xf]
  %v93 = vld [vmem:[%s1 + $0xc8] sm:$0xf]
  %v94 = vld [vmem:[%s1 + $0xcc] sm:$0xf]
  %v95 = vld [vmem:[%s1 + $0xd0] sm:$0xf]
  %v96 = vld [vmem:[%s1 + $0xd4] sm:$0xf]
  %v97 = vld [vmem:[%s1 + $0xd8] sm:$0xf]
  %v98 = vld [vmem:[%s1 + $0xdc] sm:$0xf]
  %v99 = vld [vmem:[%s1 + $0xe0] sm:$0xf]
  %v100 = vld [vmem:[%s1 + $0xe4] sm:$0xf]
  %v101 = vld [vmem:[%s1 + $0xe8] sm:$0xf]
  %v102 = vld [vmem:[%s1 + $0xec] sm:$0xf]
  %v103 = vld [vmem:[%s1 + $0xf0] sm:$0xf]
  %v104 = vld [vmem:[%s1 + $0xf4] sm:$0xf]
  %v105 = vld [vmem:[%s1 + $0xf8] sm:$0xf]
  %v106 = vld [vmem:[%s1 + $0xfc] sm:$0xf]
  %v107 = vld [vmem:[%s1 + $0x100] sm:$0xf]
  %v108 = vld [vmem:[%s1 + $0x104] sm:$0xf]
  %v109 = vld [vmem:[%s1 + $0x108] sm:$0xf]
  %v110 = vld [vmem:[%s1 + $0x10c] sm:$0xf]
  %v111 = vld [vmem:[%s1 + $0x110] sm:$0xf]
  %v112 = vld [vmem:[%s1 + $0x114] sm:$0xf]
  %v113 = vld [vmem:[%s1 + $0x118] sm:$0xf]
  %v114 = vld [vmem:[%s1 + $0x11c] sm:$0xf]
  %v115 = vld [vmem:[%s1 + $0x120] sm:$0xf]
  %v116 = vld [vmem:[%s1 + $0x124] sm:$0xf]
  %v117 = vld [vmem:[%s1 + $0x128] sm:$0xf]
  %v118 = vld [vmem:[%s1 + $0x12c] sm:$0xf]
  %v119 = vld [vmem:[%s1 + $0x130] sm:$0xf]
  %v120 = vld [vmem:[%s1 + $0x134] sm:$0xf]
  %v121 = vld [vmem:[%s1 + $0x138] sm:$0xf]
  %v122 = vld [vmem:[%s1 + $0x13c] sm:$0xf]
  %v123 = vld [vmem:[%s1 + $0x140] sm:$0xf]
  %v124 = vld [vmem:[%s1 + $0x144] sm:$0xf]
  %v125 = vld [vmem:[%s1 + $0x148] sm:$0xf]
  %v126 = vld [vmem:[%s1 + $0x14c] sm:$0xf]
  %v127 = vld [vmem:[%s1 + $0x150] sm:$0xf]
  %v128 = vld [vmem:[%s1 + $0x154] sm:$0xf]
  %v129 = vld [vmem:[%s1 + $0x158] sm:$0xf]
  %v130 = vld [vmem:[%s1 + $0x15c] sm:$0xf]
  %v131 = vld [vmem:[%s1 + $0x160] sm:$0xf]
  %v132 = vld [vmem:[%s1 + $0x164] sm:$0xf]
  %v133 = vld [vmem:[%s1 + $0x168] sm:$0xf]
  %v134 = vld [vmem:[%s1 + $0x16c] sm:$0xf]
  %v135 = vld [vmem:[%s1 + $0x170] sm:$0xf]
  %v136 = vld [vmem:[%s1 + $0x174] sm:$0xf]
  %v137 = vld [vmem:[%s1 + $0x178] sm:$0xf]
  %v138 = vld [vmem:[%s1 + $0x17c] sm:$0xf]
  %v139 = vld [vmem:[%s2] sm:$0x1]
  %v141 = vperm.slane %v139, 0
  %v239 = vunpack.c.l.b16 %v43
  %v240 = vunpack.c.l.b16 %v44
  %v241 = vunpack.c.l.b16 %v45
  %v242 = vunpack.c.l.b16 %v46
  %v243 = vunpack.c.l.b16 %v47
  %v244 = vunpack.c.l.b16 %v48
  %v245 = vunpack.c.l.b16 %v49
  %v246 = vunpack.c.l.b16 %v50
  %v247 = vunpack.c.l.b16 %v51
  %v248 = vunpack.c.l.b16 %v52
  %v249 = vunpack.c.l.b16 %v53
  %v250 = vunpack.c.l.b16 %v54
  %v251 = vunpack.c.l.b16 %v55
  %v252 = vunpack.c.l.b16 %v56
  %v253 = vunpack.c.l.b16 %v57
  %v254 = vunpack.c.l.b16 %v58
  %v255 = vunpack.c.l.b16 %v59
  %v256 = vunpack.c.l.b16 %v60
  %v257 = vunpack.c.l.b16 %v61
  %v258 = vunpack.c.l.b16 %v62
  %v259 = vunpack.c.l.b16 %v63
  %v260 = vunpack.c.l.b16 %v64
  %v261 = vunpack.c.l.b16 %v65
  %v262 = vunpack.c.l.b16 %v66
  %v263 = vunpack.c.l.b16 %v67
  %v264 = vunpack.c.l.b16 %v68
  %v265 = vunpack.c.l.b16 %v69
  %v266 = vunpack.c.l.b16 %v70
  %v267 = vunpack.c.l.b16 %v71
  %v268 = vunpack.c.l.b16 %v72
  %v269 = vunpack.c.l.b16 %v73
  %v270 = vunpack.c.l.b16 %v74
  %v271 = vunpack.c.l.b16 %v75
  %v272 = vunpack.c.l.b16 %v76
  %v273 = vunpack.c.l.b16 %v77
  %v274 = vunpack.c.l.b16 %v78
  %v275 = vunpack.c.l.b16 %v79
  %v276 = vunpack.c.l.b16 %v80
  %v277 = vunpack.c.l.b16 %v81
  %v278 = vunpack.c.l.b16 %v82
  %v279 = vunpack.c.l.b16 %v83
  %v280 = vunpack.c.l.b16 %v84
  %v281 = vunpack.c.l.b16 %v85
  %v282 = vunpack.c.l.b16 %v86
  %v283 = vunpack.c.l.b16 %v87
  %v284 = vunpack.c.l.b16 %v88
  %v285 = vunpack.c.l.b16 %v89
  %v286 = vunpack.c.l.b16 %v90
  %v287 = vunpack.c.l.b16 %v91
  %v288 = vunpack.c.l.b16 %v92
  %v289 = vunpack.c.l.b16 %v93
  %v290 = vunpack.c.l.b16 %v94
  %v291 = vunpack.c.l.b16 %v95
  %v292 = vunpack.c.l.b16 %v96
  %v293 = vunpack.c.l.b16 %v97
  %v294 = vunpack.c.l.b16 %v98
  %v295 = vunpack.c.l.b16 %v99
  %v296 = vunpack.c.l.b16 %v100
  %v297 = vunpack.c.l.b16 %v101
  %v298 = vunpack.c.l.b16 %v102
  %v299 = vunpack.c.l.b16 %v103
  %v300 = vunpack.c.l.b16 %v104
  %v301 = vunpack.c.l.b16 %v105
  %v302 = vunpack.c.l.b16 %v106
  %v303 = vunpack.c.l.b16 %v107
  %v304 = vunpack.c.l.b16 %v108
  %v305 = vunpack.c.l.b16 %v109
  %v306 = vunpack.c.l.b16 %v110
  %v307 = vunpack.c.l.b16 %v111
  %v308 = vunpack.c.l.b16 %v112
  %v309 = vunpack.c.l.b16 %v113
  %v310 = vunpack.c.l.b16 %v114
  %v311 = vunpack.c.l.b16 %v115
  %v312 = vunpack.c.l.b16 %v116
  %v313 = vunpack.c.l.b16 %v117
  %v314 = vunpack.c.l.b16 %v118
  %v315 = vunpack.c.l.b16 %v119
  %v316 = vunpack.c.l.b16 %v120
  %v317 = vunpack.c.l.b16 %v121
  %v318 = vunpack.c.l.b16 %v122
  %v319 = vunpack.c.l.b16 %v123
  %v320 = vunpack.c.l.b16 %v124
  %v321 = vunpack.c.l.b16 %v125
  %v322 = vunpack.c.l.b16 %v126
  %v323 = vunpack.c.l.b16 %v127
  %v324 = vunpack.c.l.b16 %v128
  %v325 = vunpack.c.l.b16 %v129
  %v326 = vunpack.c.l.b16 %v130
  %v327 = vunpack.c.l.b16 %v131
  %v328 = vunpack.c.l.b16 %v132
  %v329 = vunpack.c.l.b16 %v133
  %v330 = vunpack.c.l.b16 %v134
  %v331 = vunpack.c.l.b16 %v135
  %v332 = vunpack.c.l.b16 %v136
  %v333 = vunpack.c.l.b16 %v137
  %v334 = vunpack.c.l.b16 %v138
  %v335 = vpack.c.b16 %v240, %v239
  %v336 = vpack.c.b16 %v242, %v241
  %v337 = vpack.c.b16 %v244, %v243
  %v338 = vpack.c.b16 %v246, %v245
  %v339 = vpack.c.b16 %v248, %v247
  %v340 = vpack.c.b16 %v250, %v249
  %v341 = vpack.c.b16 %v252, %v251
  %v342 = vpack.c.b16 %v254, %v253
  %v343 = vpack.c.b16 %v256, %v255
  %v344 = vpack.c.b16 %v258, %v257
  %v345 = vpack.c.b16 %v260, %v259
  %v346 = vpack.c.b16 %v262, %v261
  %v347 = vpack.c.b16 %v264, %v263
  %v348 = vpack.c.b16 %v266, %v265
  %v349 = vpack.c.b16 %v268, %v267
  %v350 = vpack.c.b16 %v270, %v269
  %v351 = vpack.c.b16 %v272, %v271
  %v352 = vpack.c.b16 %v274, %v273
  %v353 = vpack.c.b16 %v276, %v275
  %v354 = vpack.c.b16 %v278, %v277
  %v355 = vpack.c.b16 %v280, %v279
  %v356 = vpack.c.b16 %v282, %v281
  %v357 = vpack.c.b16 %v284, %v283
  %v358 = vpack.c.b16 %v286, %v285
  %v359 = vpack.c.b16 %v288, %v287
  %v360 = vpack.c.b16 %v290, %v289
  %v361 = vpack.c.b16 %v292, %v291
  %v362 = vpack.c.b16 %v294, %v293
  %v363 = vpack.c.b16 %v296, %v295
  %v364 = vpack.c.b16 %v298, %v297
  %v365 = vpack.c.b16 %v300, %v299
  %v366 = vpack.c.b16 %v302, %v301
  %v367 = vpack.c.b16 %v304, %v303
  %v368 = vpack.c.b16 %v306, %v305
  %v369 = vpack.c.b16 %v308, %v307
  %v370 = vpack.c.b16 %v310, %v309
  %v371 = vpack.c.b16 %v312, %v311
  %v372 = vpack.c.b16 %v314, %v313
  %v373 = vpack.c.b16 %v316, %v315
  %v374 = vpack.c.b16 %v318, %v317
  %v375 = vpack.c.b16 %v320, %v319
  %v376 = vpack.c.b16 %v322, %v321
  %v377 = vpack.c.b16 %v324, %v323
  %v378 = vpack.c.b16 %v326, %v325
  %v379 = vpack.c.b16 %v328, %v327
  %v380 = vpack.c.b16 %v330, %v329
  %v381 = vpack.c.b16 %v332, %v331
  %v382 = vpack.c.b16 %v334, %v333
  %431 = vmatpush.bf16.msra.mxu0 %v342
  %432 = vmatpush.bf16.msra.mxu0 %v341
  %433 = vmatpush.bf16.msra.mxu0 %v340
  %434 = vmatpush.bf16.msra.mxu0 %v339
  %435 = vmatpush.bf16.msra.mxu0 %v338
  %436 = vmatpush.bf16.msra.mxu0 %v337
  %437 = vmatpush.bf16.msra.mxu0 %v336
  %438 = vmatpush.bf16.msra.mxu0 %v335
  %439 = vmatmul.bf16.gmra.mxu0 %v37
  %v440 = vpop.f32.mrf.mxu0
  %v441 = vadd.f32 %v141, %v440
  %v442 = vpop.f32.mrf.mxu0
  %443 = vdwg.mxu0
  %444 = vmatpush.bf16.msra.mxu0 %v350
  %445 = vmatpush.bf16.msra.mxu0 %v349
  %446 = vmatpush.bf16.msra.mxu0 %v348
  %447 = vmatpush.bf16.msra.mxu0 %v347
  %448 = vmatpush.bf16.msra.mxu0 %v346
  %449 = vmatpush.bf16.msra.mxu0 %v345
  %450 = vmatpush.bf16.msra.mxu0 %v344
  %451 = vmatpush.bf16.msra.mxu0 %v343
  %452 = vmatmul.bf16.gmra.mxu0 %v38
  %v453 = vpop.f32.mrf.mxu0
  %v454 = vadd.f32 %v441, %v453
  %v455 = vpop.f32.mrf.mxu0
  %456 = vdwg.mxu0
  %457 = vmatpush.bf16.msra.mxu0 %v358
  %458 = vmatpush.bf16.msra.mxu0 %v357
  %459 = vmatpush.bf16.msra.mxu0 %v356
  %460 = vmatpush.bf16.msra.mxu0 %v355
  %461 = vmatpush.bf16.msra.mxu0 %v354
  %462 = vmatpush.bf16.msra.mxu0 %v353
  %463 = vmatpush.bf16.msra.mxu0 %v352
  %464 = vmatpush.bf16.msra.mxu0 %v351
  %465 = vmatmul.bf16.gmra.mxu0 %v39
  %v466 = vpop.f32.mrf.mxu0
  %v467 = vadd.f32 %v454, %v466
  %v468 = vpop.f32.mrf.mxu0
  %469 = vdwg.mxu0
  %470 = vmatpush.bf16.msra.mxu0 %v366
  %471 = vmatpush.bf16.msra.mxu0 %v365
  %472 = vmatpush.bf16.msra.mxu0 %v364
  %473 = vmatpush.bf16.msra.mxu0 %v363
  %474 = vmatpush.bf16.msra.mxu0 %v362
  %475 = vmatpush.bf16.msra.mxu0 %v361
  %476 = vmatpush.bf16.msra.mxu0 %v360
  %477 = vmatpush.bf16.msra.mxu0 %v359
  %478 = vmatmul.bf16.gmra.mxu0 %v40
  %v479 = vpop.f32.mrf.mxu0
  %v480 = vadd.f32 %v467, %v479
  %v481 = vpop.f32.mrf.mxu0
  %482 = vdwg.mxu0
  %483 = vmatpush.bf16.msra.mxu0 %v374
  %484 = vmatpush.bf16.msra.mxu0 %v373
  %485 = vmatpush.bf16.msra.mxu0 %v372
  %486 = vmatpush.bf16.msra.mxu0 %v371
  %487 = vmatpush.bf16.msra.mxu0 %v370
  %488 = vmatpush.bf16.msra.mxu0 %v369
  %489 = vmatpush.bf16.msra.mxu0 %v368
  %490 = vmatpush.bf16.msra.mxu0 %v367
  %491 = vmatmul.bf16.gmra.mxu0 %v41
  %v492 = vpop.f32.mrf.mxu0
  %v493 = vadd.f32 %v480, %v492
  %v494 = vpop.f32.mrf.mxu0
  %495 = vdwg.mxu0
  %496 = vmatpush.bf16.msra.mxu0 %v382
  %497 = vmatpush.bf16.msra.mxu0 %v381
  %498 = vmatpush.bf16.msra.mxu0 %v380
  %499 = vmatpush.bf16.msra.mxu0 %v379
  %500 = vmatpush.bf16.msra.mxu0 %v378
  %501 = vmatpush.bf16.msra.mxu0 %v377
  %502 = vmatpush.bf16.msra.mxu0 %v376
  %503 = vmatpush.bf16.msra.mxu0 %v375
  %504 = vmatmul.bf16.gmra.mxu0 %v42
  %v505 = vpop.f32.mrf.mxu0
  %v506 = vadd.f32 %v493, %v505
  %v507 = vpop.f32.mrf.mxu0
  %508 = vdwg.mxu0
  %509 = vst [vmem:[%s3] sm:$0xf] %v506
  // Predicated region
  $region14: #{sol_forward.1} parent=0 // pred_check
    _
  $region15: #{sol_forward.1} parent=0 // pred_check_branch
    %511 = sbr.rel (0) target = $region17
  $region16: #{sol_forward.1} parent=0 // pred_region
    _
  $region17: #{sol_forward.1} parent=0 // pred_fallthru
    _
  // Predicated region
  $region18: #{sol_forward.1} parent=0 // pred_check
    _
  $region19: #{sol_forward.1} parent=0 // pred_check_branch
    %513 = sbr.rel (0) target = $region21
  $region20: #{sol_forward.1} parent=0 // pred_region
    _
  $region21: #{sol_forward.1} parent=0 // pred_fallthru
    _

</llo_original>
